<compile_context>
chip_gen: v7x
topology: tpu7x:2x2x1
jax: 0.10.0
libtpu: 0.0.40
codegen_flags: <defaults>
</compile_context>

<pallas_src>
import functools

import jax
import jax.numpy as jnp
from jax.experimental import pallas as pl
from jax.experimental.pallas import tpu as pltpu


_MIN_TILE = 16  # bf16 sublane packing: (16, 128) min tile


def _round_up(n, m):
    return ((n + m - 1) // m) * m


def _fused_mlp_kernel(*refs, n_hidden_layers: int):
    # refs = (x_ref, w0, b0, w1, b1, ..., head_w, head_b, o_ref)
    x_ref = refs[0]
    o_ref = refs[-1]
    p = refs[1:-1]

    h = x_ref[...]  # bf16 straight from HBM
    for i in range(n_hidden_layers):
        w = p[2 * i][...]          # (Din_i, Dout_i) bf16
        b = p[2 * i + 1][...]      # (1, Dout_i)     f32
        acc = jnp.dot(h, w, preferred_element_type=jnp.float32)  # f32 accum
        a = jnp.maximum(acc + b, 0.0)                            # f32 elementwise
        h = a.astype(jnp.bfloat16)  # narrow only at the next MXU feed
    head_w = p[2 * n_hidden_layers][...]      # (H_last, 6) bf16
    head_b = p[2 * n_hidden_layers + 1][...]  # (1, 6)      f32
    y = jnp.dot(h, head_w, preferred_element_type=jnp.float32) + head_b
    o_ref[...] = y.astype(o_ref.dtype)


def fused_mlp_forward(x, params, n_hidden_layers, *, max_batch_tile=1024):
    """Entire MLP (hidden stack + fused 6-wide head) in one pallas_call.

    x: (B, Din) bf16.  params: flat tuple (w0,b0,...,head_w,head_b) with bf16
    weights / f32 (1, Dout) biases.  Returns (B, 6) f32.
    """
    B, Din = x.shape
    out_dim = params[-1].shape[-1]
    kernel = functools.partial(_fused_mlp_kernel,
                               n_hidden_layers=n_hidden_layers)

    if B < 2 * _MIN_TILE:
        # Tiny batches: grid-less single invocation (launch overhead
        # dominates; splitting across v7x's 2 TCs isn't worth it here).
        bp = _round_up(B, _MIN_TILE)
        xp = jnp.pad(x, ((0, bp - B), (0, 0))) if bp != B else x
        out = pl.pallas_call(
            kernel,
            out_shape=jax.ShapeDtypeStruct((bp, out_dim), jnp.float32),
        )(xp, *params)
        return out[:B]

    # Gridded path: >= 2 grid steps so both v7x TensorCores get work; tiles
    # are multiples of 16 (bf16 sublane packing), capped at max_batch_tile.
    tb = min(max_batch_tile, _round_up(pl.cdiv(B, 2), _MIN_TILE))
    bp = _round_up(B, tb)  # pad so there is no ragged last tile
    xp = jnp.pad(x, ((0, bp - B), (0, 0))) if bp != B else x
    grid = bp // tb

    in_specs = [pl.BlockSpec((tb, Din), lambda i: (i, 0))]
    # Constant (0,0) index_map: block index never changes across grid steps,
    # so the pipeline skips the re-DMA -- weights are fetched once.
    in_specs += [pl.BlockSpec(p.shape, lambda i: (0, 0)) for p in params]

    out = pl.pallas_call(
        kernel,
        out_shape=jax.ShapeDtypeStruct((bp, out_dim), jnp.float32),
        grid=(grid,),
        in_specs=in_specs,
        out_specs=pl.BlockSpec((tb, out_dim), lambda i: (i, 0)),
        compiler_params=pltpu.CompilerParams(
            dimension_semantics=("parallel",),
        ),
    )(xp, *params)
    return out[:B]


def _model_forward(x, params, *, n_hidden_layers):
    """flatten -> fused MLP kernel -> split logits/rect (all under one jit)."""
    B = x.shape[0]
    feats = x.reshape(B, -1).astype(jnp.bfloat16)  # HBM-side data is bf16
    out = fused_mlp_forward(feats, params, n_hidden_layers)
    return out[:, :2], out[:, 2:6]


class MLPDetectorPallas:
    """Pallas re-implementation of _MLPDetector's forward pass."""

    def __init__(self, image_shape, n_hidden, key):
        self.image_shape = tuple(image_shape)
        self.n_hidden = list(n_hidden)
        flat = 1
        for d in self.image_shape:
            flat *= d

        # Deterministic parameter init (uniform, like torch default scale).
        def init_linear(key, fan_in, fan_out):
            kw, kb = jax.random.split(key)
            bound = 1.0 / jnp.sqrt(float(fan_in))
            # Stored already transposed: (in, out) -- y = x @ w_t + b.
            w_t = jax.random.uniform(kw, (fan_in, fan_out), jnp.float32,
                                     -bound, bound)
            b = jax.random.uniform(kb, (fan_out,), jnp.float32, -bound, bound)
            return w_t, b

        keys = jax.random.split(key, len(self.n_hidden) + 2)
        hidden_w, hidden_b = [], []
        n_prev = flat
        for i, nh in enumerate(self.n_hidden):
            w_t, b = init_linear(keys[i], n_prev, nh)
            hidden_w.append(w_t.astype(jnp.bfloat16))   # bf16 weight storage
            hidden_b.append(b.reshape(1, -1))            # f32 (1, Dout) bias
            n_prev = nh
        clf_w, clf_b = init_linear(keys[-2], n_prev, 2)
        reg_w, reg_b = init_linear(keys[-1], n_prev, 4)

        # Fused head: one (n_prev, 6) matmul covers clf (2) + reg (4).
        self._hidden_w = hidden_w
        self._hidden_b = hidden_b
        self._head_w = jnp.concatenate([clf_w, reg_w], axis=1).astype(jnp.bfloat16)
        self._head_b = jnp.concatenate([clf_b, reg_b], axis=0).reshape(1, -1)

        # Flat param tuple built ONCE (no per-call reshape/concat dispatches).
        params = []
        for w, b in zip(self._hidden_w, self._hidden_b):
            params += [w, b]
        params += [self._head_w, self._head_b]
        self._params = tuple(params)

        self._forward = jax.jit(functools.partial(
            _model_forward, n_hidden_layers=len(self.n_hidden)))

    def __call__(self, x):
        # x: (B, C, H, W) NCHW, flattened row-major exactly like nn.Flatten.
        return self._forward(x, self._params)


def _reference_forward(model, x):
    # Plain-JAX reference replicating the kernel's numerics (bf16 operands,
    # f32 accumulation / elementwise).
    B = x.shape[0]
    f = x.reshape(B, -1).astype(jnp.bfloat16)
    for w, b in zip(model._hidden_w, model._hidden_b):
        a = jnp.dot(f, w, preferred_element_type=jnp.float32) + b
        f = jnp.maximum(a, 0.0).astype(jnp.bfloat16)
    y = jnp.dot(f, model._head_w, preferred_element_type=jnp.float32) + model._head_b
    return y[:, :2], y[:, 2:6]


def _check(model, x, batch):
    logits, rect = model(x)
    logits, rect = jax.block_until_ready((logits, rect))
    ref_logits, ref_rect = _reference_forward(model, x)
    assert logits.shape == (batch, 2) and rect.shape == (batch, 4)
    assert jnp.allclose(logits, ref_logits, atol=1e-2, rtol=1e-2)
    assert jnp.allclose(rect, ref_rect, atol=1e-2, rtol=1e-2)


if __name__ == "__main__":
    key = jax.random.PRNGKey(0)
    k_param, k_x, k_x_big, k_x_odd = jax.random.split(key, 4)

    image_shape = (4, 16, 16)          # (C, H, W)
    n_hidden = [128, 64]
    batch = 2

    model = MLPDetectorPallas(image_shape, n_hidden, k_param)

    # Small batch: grid-less fully-fused kernel path (padded to 16 rows).
    x = jax.random.normal(k_x, (batch,) + image_shape, dtype=jnp.float32)
    _check(model, x, batch)

    # Larger batch: batch-tiled ("parallel") path, 2 grid steps of 256 rows.
    big_batch = 512
    xb = jax.random.normal(k_x_big, (big_batch,) + image_shape,
                           dtype=jnp.float32)
    _check(model, xb, big_batch)

    # Non-divisible batch: exercises wrapper-side padding + output slicing.
    odd_batch = 300
    xo = jax.random.normal(k_x_odd, (odd_batch,) + image_shape,
                           dtype=jnp.float32)
    _check(model, xo, odd_batch)

    print("KERNEL_OK")
</pallas_src>

<mosaic_0001>
module attributes {stable_mosaic.version = 11 : i64} {
  func.func @_fused_mlp_kernel(%arg0: memref<16x1024xbf16, #tpu.memory_space<vmem>>, %arg1: memref<1024x128xbf16, #tpu.memory_space<vmem>>, %arg2: memref<1x128xf32, #tpu.memory_space<vmem>>, %arg3: memref<128x64xbf16, #tpu.memory_space<vmem>>, %arg4: memref<1x64xf32, #tpu.memory_space<vmem>>, %arg5: memref<64x6xbf16, #tpu.memory_space<vmem>>, %arg6: memref<1x6xf32, #tpu.memory_space<vmem>>, %arg7: memref<16x6xf32, #tpu.memory_space<vmem>>) attributes {dimension_semantics = [], scalar_prefetch = 0 : i64, scratch_operands = 0 : i64, tpu.core_type = #tpu.core_type<tc>} {
    %c0 = arith.constant 0 : index
    %c0_0 = arith.constant 0 : index
    %0 = vector.load %arg0[%c0, %c0_0] : memref<16x1024xbf16, #tpu.memory_space<vmem>>, vector<16x1024xbf16>
    %c0_1 = arith.constant 0 : index
    %c0_2 = arith.constant 0 : index
    %1 = vector.load %arg1[%c0_1, %c0_2] : memref<1024x128xbf16, #tpu.memory_space<vmem>>, vector<1024x128xbf16>
    %c0_3 = arith.constant 0 : index
    %c0_4 = arith.constant 0 : index
    %2 = vector.load %arg2[%c0_3, %c0_4] : memref<1x128xf32, #tpu.memory_space<vmem>>, vector<1x128xf32>
    %cst = arith.constant dense<0.000000e+00> : vector<16x128xf32>
    %3 = tpu.matmul %0, %1, %cst {dimension_numbers = #tpu.dot_dimension_numbers<[1], [0], [0], [1], [0, 0, 1, 1], [], []>} : vector<16x1024xbf16>, vector<1024x128xbf16>, vector<16x128xf32> -> vector<16x128xf32>
    %4 = vector.broadcast %2 : vector<1x128xf32> to vector<16x128xf32>
    %5 = arith.addf %3, %4 : vector<16x128xf32>
    %cst_5 = arith.constant 0.000000e+00 : f32
    %6 = vector.broadcast %cst_5 : f32 to vector<16x128xf32>
    %7 = arith.maximumf %5, %6 : vector<16x128xf32>
    %8 = arith.truncf %7 : vector<16x128xf32> to vector<16x128xbf16>
    %c0_6 = arith.constant 0 : index
    %c0_7 = arith.constant 0 : index
    %9 = vector.load %arg3[%c0_6, %c0_7] : memref<128x64xbf16, #tpu.memory_space<vmem>>, vector<128x64xbf16>
    %c0_8 = arith.constant 0 : index
    %c0_9 = arith.constant 0 : index
    %10 = vector.load %arg4[%c0_8, %c0_9] : memref<1x64xf32, #tpu.memory_space<vmem>>, vector<1x64xf32>
    %cst_10 = arith.constant dense<0.000000e+00> : vector<16x64xf32>
    %11 = tpu.matmul %8, %9, %cst_10 {dimension_numbers = #tpu.dot_dimension_numbers<[1], [0], [0], [1], [0, 0, 1, 1], [], []>} : vector<16x128xbf16>, vector<128x64xbf16>, vector<16x64xf32> -> vector<16x64xf32>
    %12 = vector.broadcast %10 : vector<1x64xf32> to vector<16x64xf32>
    %13 = arith.addf %11, %12 : vector<16x64xf32>
    %cst_11 = arith.constant 0.000000e+00 : f32
    %14 = vector.broadcast %cst_11 : f32 to vector<16x64xf32>
    %15 = arith.maximumf %13, %14 : vector<16x64xf32>
    %16 = arith.truncf %15 : vector<16x64xf32> to vector<16x64xbf16>
    %c0_12 = arith.constant 0 : index
    %c0_13 = arith.constant 0 : index
    %17 = vector.load %arg5[%c0_12, %c0_13] : memref<64x6xbf16, #tpu.memory_space<vmem>>, vector<64x6xbf16>
    %c0_14 = arith.constant 0 : index
    %c0_15 = arith.constant 0 : index
    %18 = vector.load %arg6[%c0_14, %c0_15] : memref<1x6xf32, #tpu.memory_space<vmem>>, vector<1x6xf32>
    %cst_16 = arith.constant dense<0.000000e+00> : vector<16x6xf32>
    %19 = tpu.matmul %16, %17, %cst_16 {dimension_numbers = #tpu.dot_dimension_numbers<[1], [0], [0], [1], [0, 0, 1, 1], [], []>} : vector<16x64xbf16>, vector<64x6xbf16>, vector<16x6xf32> -> vector<16x6xf32>
    %20 = vector.broadcast %18 : vector<1x6xf32> to vector<16x6xf32>
    %21 = arith.addf %19, %20 : vector<16x6xf32>
    %c0_17 = arith.constant 0 : index
    %c0_18 = arith.constant 0 : index
    %22 = vector.load %arg7[%c0_17, %c0_18] : memref<16x6xf32, #tpu.memory_space<vmem>>, vector<16x6xf32>
    tpu.vector_store %arg7[%c0_17, %c0_18], %21 {strides = array<i32>} : memref<16x6xf32, #tpu.memory_space<vmem>>, vector<16x6xf32>,
    return
  }
}

</mosaic_0001>

<llo_original>
// kernel: _model_forward.1
$region0: #{_model_forward.1}
  #allocation0 [shape = 'u32[]', space=smem, size = 0x4, offset = 0x4, fixed_abs, tag = 'smem constant byte address 0x4 - core index']
  #allocation1 [shape = 'u32[144,128]{1,0:T(1,128)}', space=vmem, size = 0x12000, scoped, tag = 'internal scratch']
  %s0 = inlined_call_operand.vmem [shape: bf16[16,1024], index: 0, kind: input, shape index: {}]
  %s1 = inlined_call_operand.hbm [shape: bf16[1024,128], index: 1, kind: input, shape index: {}]
  %s2 = inlined_call_operand.vmem [shape: f32[1,128], index: 2, kind: input, shape index: {}]
  %s3 = inlined_call_operand.vmem [shape: bf16[128,64], index: 3, kind: input, shape index: {}]
  %s4 = inlined_call_operand.vmem [shape: f32[1,64], index: 4, kind: input, shape index: {}]
  %s5 = inlined_call_operand.vmem [shape: bf16[64,6], index: 5, kind: input, shape index: {}]
  %s6 = inlined_call_operand.vmem [shape: f32[1,6], index: 6, kind: input, shape index: {}]
  %s7 = inlined_call_operand.vmem [shape: f32[16,6], index: 7, kind: output, shape index: {}]
  %s8 = sld [smem:[#allocation0]]
  $region42: #{_model_forward.1} parent=0
    _
  %s10 = ssub.s32 1, %s8
  %s11 = scalar_select 0, %s10, %s8
  $region1: #{_model_forward.1} parent=0
    #allocation2 [shape = 'u8[262144]{0}', space=vmem, size = 0x40000, scoped, tag = 'input window, operand 1, single buffered']
    #allocation3 [shape = 's32[1]{0}', space=sflag, size = 0x4, scoped, tag = 'scoped memory for _model_forward.1']
    %12 = vsyncpa [#allocation3], 0
    // Predicated region
    $region2: #{_model_forward.1} parent=1 // pred_check
      _
    $region3: #{_model_forward.1} parent=1 // pred_check_branch
      %14 = sbr.rel (0) target = $region5
    $region4: #{_model_forward.1} parent=1 // pred_region
      _
    $region5: #{_model_forward.1} parent=1 // pred_fallthru
      _
    // Predicated region
    $region6: #{_model_forward.1} parent=1 // pred_check
      _
    $region7: #{_model_forward.1} parent=1 // pred_check_branch
      %16 = sbr.rel (0) target = $region9
    $region8: #{_model_forward.1} parent=1 // pred_region
      %s18 = ssub.s32 8192, 8192
      %19 = vsyncadd [#allocation3], %s18
      %s20 = sshll.u32 [#allocation2], 4
      %s21 = int_to_ptr.vmem [resolvable:$true] %s20
      %26 = dma.hbm_to_vmem [thread:$0]  %s1, 8192, %s21, [#allocation3], 64, 64, 4
    $region9: #{_model_forward.1} parent=1 // pred_fallthru
      _
    // Predicated region
    $region10: #{_model_forward.1} parent=1 // pred_check
      _
    $region11: #{_model_forward.1} parent=1 // pred_check_branch
      %28 = sbr.rel (0) target = $region13
    $region12: #{_model_forward.1} parent=1 // pred_region
      _
    $region13: #{_model_forward.1} parent=1 // pred_fallthru
      _
    // Predicated region
    $region14: #{_model_forward.1} parent=1 // pred_check
      _
    $region15: #{_model_forward.1} parent=1 // pred_check_branch
      %30 = sbr.rel (0) target = $region17
    $region16: #{_model_forward.1} parent=1 // pred_region
      _
    $region17: #{_model_forward.1} parent=1 // pred_fallthru
      _
    // Predicated region
    $region18: #{_model_forward.1} parent=1 // pred_check
      _
    $region19: #{_model_forward.1} parent=1 // pred_check_branch
      %32 = sbr.rel (0) target = $region21
    $region20: #{_model_forward.1} parent=1 // pred_region
      _
    $region21: #{_model_forward.1} parent=1 // pred_fallthru
      _
    // Predicated region
    $region22: #{_model_forward.1} parent=1 // pred_check
      _
    $region23: #{_model_forward.1} parent=1 // pred_check_branch
      %34 = sbr.rel (0) target = $region25
    $region24: #{_model_forward.1} parent=1 // pred_region
      _
    $region25: #{_model_forward.1} parent=1 // pred_fallthru
      _
    // Predicated region
    $region26: #{_model_forward.1} parent=1 // pred_check
      _
    $region27: #{_model_forward.1} parent=1 // pred_check_branch
      %36 = sbr.rel (0) target = $region29
    $region28: #{_model_forward.1} parent=1 // pred_region
      _
    $region29: #{_model_forward.1} parent=1 // pred_fallthru
      _
    // Predicated region
    $region30: #{_model_forward.1} parent=1 // pred_check
      _
    $region31: #{_model_forward.1} parent=1 // pred_check_branch
      %38 = sbr.rel (0) target = $region33
    $region32: #{_model_forward.1} parent=1 // pred_region
      %39 = dma.done [#allocation3], 8192
    $region33: #{_model_forward.1} parent=1 // pred_fallthru
      _
    %v41 = vld [vmem:[%s0] sm:$0xff]
    %v42 = vld [vmem:[%s0 + $0x8] sm:$0xff]
    %v43 = vld [vmem:[%s0 + $0x10] sm:$0xff]
    %v44 = vld [vmem:[%s0 + $0x18] sm:$0xff]
    %v45 = vld [vmem:[%s0 + $0x20] sm:$0xff]
    %v46 = vld [vmem:[%s0 + $0x28] sm:$0xff]
    %v47 = vld [vmem:[%s0 + $0x30] sm:$0xff]
    %v48 = vld [vmem:[%s0 + $0x38] sm:$0xff]
    %v49 = vld [vmem:[#allocation2] sm:$0xf]
    %v50 = vld [vmem:[#allocation2 + $0x4] sm:$0xf]
    %v51 = vld [vmem:[#allocation2 + $0x8] sm:$0xf]
    %v52 = vld [vmem:[#allocation2 + $0xc] sm:$0xf]
    %v53 = vld [vmem:[#allocation2 + $0x10] sm:$0xf]
    %v54 = vld [vmem:[#allocation2 + $0x14] sm:$0xf]
    %v55 = vld [vmem:[#allocation2 + $0x18] sm:$0xf]
    %v56 = vld [vmem:[#allocation2 + $0x1c] sm:$0xf]
    %v57 = vld [vmem:[#allocation2 + $0x20] sm:$0xf]
    %v58 = vld [vmem:[#allocation2 + $0x24] sm:$0xf]
    %v59 = vld [vmem:[#allocation2 + $0x28] sm:$0xf]
    %v60 = vld [vmem:[#allocation2 + $0x2c] sm:$0xf]
    %v61 = vld [vmem:[#allocation2 + $0x30] sm:$0xf]
    %v62 = vld [vmem:[#allocation2 + $0x34] sm:$0xf]
    %v63 = vld [vmem:[#allocation2 + $0x38] sm:$0xf]
    %v64 = vld [vmem:[#allocation2 + $0x3c] sm:$0xf]
    %v65 = vld [vmem:[#allocation2 + $0x40] sm:$0xf]
    %v66 = vld [vmem:[#allocation2 + $0x44] sm:$0xf]
    %v67 = vld [vmem:[#allocation2 + $0x48] sm:$0xf]
    %v68 = vld [vmem:[#allocation2 + $0x4c] sm:$0xf]
    %v69 = vld [vmem:[#allocation2 + $0x50] sm:$0xf]
    %v70 = vld [vmem:[#allocation2 + $0x54] sm:$0xf]
    %v71 = vld [vmem:[#allocation2 + $0x58] sm:$0xf]
    %v72 = vld [vmem:[#allocation2 + $0x5c] sm:$0xf]
    %v73 = vld [vmem:[#allocation2 + $0x60] sm:$0xf]
    %v74 = vld [vmem:[#allocation2 + $0x64] sm:$0xf]
    %v75 = vld [vmem:[#allocation2 + $0x68] sm:$0xf]
    %v76 = vld [vmem:[#allocation2 + $0x6c] sm:$0xf]
    %v77 = vld [vmem:[#allocation2 + $0x70] sm:$0xf]
    %v78 = vld [vmem:[#allocation2 + $0x74] sm:$0xf]
    %v79 = vld [vmem:[#allocation2 + $0x78] sm:$0xf]
    %v80 = vld [vmem:[#allocation2 + $0x7c] sm:$0xf]
    %v81 = vld [vmem:[#allocation2 + $0x80] sm:$0xf]
    %v82 = vld [vmem:[#allocation2 + $0x84] sm:$0xf]
    %v83 = vld [vmem:[#allocation2 + $0x88] sm:$0xf]
    %v84 = vld [vmem:[#allocation2 + $0x8c] sm:$0xf]
    %v85 = vld [vmem:[#allocation2 + $0x90] sm:$0xf]
    %v86 = vld [vmem:[#allocation2 + $0x94] sm:$0xf]
    %v87 = vld [vmem:[#allocation2 + $0x98] sm:$0xf]
    %v88 = vld [vmem:[#allocation2 + $0x9c] sm:$0xf]
    %v89 = vld [vmem:[#allocation2 + $0xa0] sm:$0xf]
    %v90 = vld [vmem:[#allocation2 + $0xa4] sm:$0xf]
    %v91 = vld [vmem:[#allocation2 + $0xa8] sm:$0xf]
    %v92 = vld [vmem:[#allocation2 + $0xac] sm:$0xf]
    %v93 = vld [vmem:[#allocation2 + $0xb0] sm:$0xf]
    %v94 = vld [vmem:[#allocation2 + $0xb4] sm:$0xf]
    %v95 = vld [vmem:[#allocation2 + $0xb8] sm:$0xf]
    %v96 = vld [vmem:[#allocation2 + $0xbc] sm:$0xf]
    %v97 = vld [vmem:[#allocation2 + $0xc0] sm:$0xf]
    %v98 = vld [vmem:[#allocation2 + $0xc4] sm:$0xf]
    %v99 = vld [vmem:[#allocation2 + $0xc8] sm:$0xf]
    %v100 = vld [vmem:[#allocation2 + $0xcc] sm:$0xf]
    %v101 = vld [vmem:[#allocation2 + $0xd0] sm:$0xf]
    %v102 = vld [vmem:[#allocation2 + $0xd4] sm:$0xf]
    %v103 = vld [vmem:[#allocation2 + $0xd8] sm:$0xf]
    %v104 = vld [vmem:[#allocation2 + $0xdc] sm:$0xf]
    %v105 = vld [vmem:[#allocation2 + $0xe0] sm:$0xf]
    %v106 = vld [vmem:[#allocation2 + $0xe4] sm:$0xf]
    %v107 = vld [vmem:[#allocation2 + $0xe8] sm:$0xf]
    %v108 = vld [vmem:[#allocation2 + $0xec] sm:$0xf]
    %v109 = vld [vmem:[#allocation2 + $0xf0] sm:$0xf]
    %v110 = vld [vmem:[#allocation2 + $0xf4] sm:$0xf]
    %v111 = vld [vmem:[#allocation2 + $0xf8] sm:$0xf]
    %v112 = vld [vmem:[#allocation2 + $0xfc] sm:$0xf]
    %v113 = vld [vmem:[#allocation2 + $0x100] sm:$0xf]
    %v114 = vld [vmem:[#allocation2 + $0x104] sm:$0xf]
    %v115 = vld [vmem:[#allocation2 + $0x108] sm:$0xf]
    %v116 = vld [vmem:[#allocation2 + $0x10c] sm:$0xf]
    %v117 = vld [vmem:[#allocation2 + $0x110] sm:$0xf]
    %v118 = vld [vmem:[#allocation2 + $0x114] sm:$0xf]
    %v119 = vld [vmem:[#allocation2 + $0x118] sm:$0xf]
    %v120 = vld [vmem:[#allocation2 + $0x11c] sm:$0xf]
    %v121 = vld [vmem:[#allocation2 + $0x120] sm:$0xf]
    %v122 = vld [vmem:[#allocation2 + $0x124] sm:$0xf]
    %v123 = vld [vmem:[#allocation2 + $0x128] sm:$0xf]
    %v124 = vld [vmem:[#allocation2 + $0x12c] sm:$0xf]
    %v125 = vld [vmem:[#allocation2 + $0x130] sm:$0xf]
    %v126 = vld [vmem:[#allocation2 + $0x134] sm:$0xf]
    %v127 = vld [vmem:[#allocation2 + $0x138] sm:$0xf]
    %v128 = vld [vmem:[#allocation2 + $0x13c] sm:$0xf]
    %v129 = vld [vmem:[#allocation2 + $0x140] sm:$0xf]
    %v130 = vld [vmem:[#allocation2 + $0x144] sm:$0xf]
    %v131 = vld [vmem:[#allocation2 + $0x148] sm:$0xf]
    %v132 = vld [vmem:[#allocation2 + $0x14c] sm:$0xf]
    %v133 = vld [vmem:[#allocation2 + $0x150] sm:$0xf]
    %v134 = vld [vmem:[#allocation2 + $0x154] sm:$0xf]
    %v135 = vld [vmem:[#allocation2 + $0x158] sm:$0xf]
    %v136 = vld [vmem:[#allocation2 + $0x15c] sm:$0xf]
    %v137 = vld [vmem:[#allocation2 + $0x160] sm:$0xf]
    %v138 = vld [vmem:[#allocation2 + $0x164] sm:$0xf]
    %v139 = vld [vmem:[#allocation2 + $0x168] sm:$0xf]
    %v140 = vld [vmem:[#allocation2 + $0x16c] sm:$0xf]
    %v141 = vld [vmem:[#allocation2 + $0x170] sm:$0xf]
    %v142 = vld [vmem:[#allocation2 + $0x174] sm:$0xf]
    %v143 = vld [vmem:[#allocation2 + $0x178] sm:$0xf]
    %v144 = vld [vmem:[#allocation2 + $0x17c] sm:$0xf]
    %v145 = vld [vmem:[#allocation2 + $0x180] sm:$0xf]
    %v146 = vld [vmem:[#allocation2 + $0x184] sm:$0xf]
    %v147 = vld [vmem:[#allocation2 + $0x188] sm:$0xf]
    %v148 = vld [vmem:[#allocation2 + $0x18c] sm:$0xf]
    %v149 = vld [vmem:[#allocation2 + $0x190] sm:$0xf]
    %v150 = vld [vmem:[#allocation2 + $0x194] sm:$0xf]
    %v151 = vld [vmem:[#allocation2 + $0x198] sm:$0xf]
    %v152 = vld [vmem:[#allocation2 + $0x19c] sm:$0xf]
    %v153 = vld [vmem:[#allocation2 + $0x1a0] sm:$0xf]
    %v154 = vld [vmem:[#allocation2 + $0x1a4] sm:$0xf]
    %v155 = vld [vmem:[#allocation2 + $0x1a8] sm:$0xf]
    %v156 = vld [vmem:[#allocation2 + $0x1ac] sm:$0xf]
    %v157 = vld [vmem:[#allocation2 + $0x1b0] sm:$0xf]
    %v158 = vld [vmem:[#allocation2 + $0x1b4] sm:$0xf]
    %v159 = vld [vmem:[#allocation2 + $0x1b8] sm:$0xf]
    %v160 = vld [vmem:[#allocation2 + $0x1bc] sm:$0xf]
    %v161 = vld [vmem:[#allocation2 + $0x1c0] sm:$0xf]
    %v162 = vld [vmem:[#allocation2 + $0x1c4] sm:$0xf]
    %v163 = vld [vmem:[#allocation2 + $0x1c8] sm:$0xf]
    %v164 = vld [vmem:[#allocation2 + $0x1cc] sm:$0xf]
    %v165 = vld [vmem:[#allocation2 + $0x1d0] sm:$0xf]
    %v166 = vld [vmem:[#allocation2 + $0x1d4] sm:$0xf]
    %v167 = vld [vmem:[#allocation2 + $0x1d8] sm:$0xf]
    %v168 = vld [vmem:[#allocation2 + $0x1dc] sm:$0xf]
    %v169 = vld [vmem:[#allocation2 + $0x1e0] sm:$0xf]
    %v170 = vld [vmem:[#allocation2 + $0x1e4] sm:$0xf]
    %v171 = vld [vmem:[#allocation2 + $0x1e8] sm:$0xf]
    %v172 = vld [vmem:[#allocation2 + $0x1ec] sm:$0xf]
    %v173 = vld [vmem:[#allocation2 + $0x1f0] sm:$0xf]
    %v174 = vld [vmem:[#allocation2 + $0x1f4] sm:$0xf]
    %v175 = vld [vmem:[#allocation2 + $0x1f8] sm:$0xf]
    %v176 = vld [vmem:[#allocation2 + $0x1fc] sm:$0xf]
    %v177 = vld [vmem:[%s2] sm:$0x1]
    %v179 = vlaneseq
    %v180 = vshrl.u32 %v179, 7
    %v181 = vsub.s32 0, %v180
    %v182 = vrot.slane %v177, %v181
    %v192 = vunpack.c.l.b16 %v41
    %v193 = vunpack.c.h.b16 %v41
    %v194 = vunpack.c.l.b16 %v42
    %v195 = vunpack.c.h.b16 %v42
    %v196 = vunpack.c.l.b16 %v43
    %v197 = vunpack.c.h.b16 %v43
    %v198 = vunpack.c.l.b16 %v44
    %v199 = vunpack.c.h.b16 %v44
    %v200 = vunpack.c.l.b16 %v45
    %v201 = vunpack.c.h.b16 %v45
    %v202 = vunpack.c.l.b16 %v46
    %v203 = vunpack.c.h.b16 %v46
    %v204 = vunpack.c.l.b16 %v47
    %v205 = vunpack.c.h.b16 %v47
    %v206 = vunpack.c.l.b16 %v48
    %v207 = vunpack.c.h.b16 %v48
    %v208 = vpack.c.b16 %v200, %v192
    %v209 = vpack.c.b16 %v201, %v193
    %v210 = vpack.c.b16 %v202, %v194
    %v211 = vpack.c.b16 %v203, %v195
    %v212 = vpack.c.b16 %v204, %v196
    %v213 = vpack.c.b16 %v205, %v197
    %v214 = vpack.c.b16 %v206, %v198
    %v215 = vpack.c.b16 %v207, %v199
    %v352 = vunpack.c.l.b16 %v49
    %v353 = vunpack.c.l.b16 %v50
    %v354 = vunpack.c.l.b16 %v51
    %v355 = vunpack.c.l.b16 %v52
    %v356 = vunpack.c.l.b16 %v53
    %v357 = vunpack.c.l.b16 %v54
    %v358 = vunpack.c.l.b16 %v55
    %v359 = vunpack.c.l.b16 %v56
    %v360 = vunpack.c.l.b16 %v57
    %v361 = vunpack.c.l.b16 %v58
    %v362 = vunpack.c.l.b16 %v59
    %v363 = vunpack.c.l.b16 %v60
    %v364 = vunpack.c.l.b16 %v61
    %v365 = vunpack.c.l.b16 %v62
    %v366 = vunpack.c.l.b16 %v63
    %v367 = vunpack.c.l.b16 %v64
    %v368 = vunpack.c.l.b16 %v65
    %v369 = vunpack.c.l.b16 %v66
    %v370 = vunpack.c.l.b16 %v67
    %v371 = vunpack.c.l.b16 %v68
    %v372 = vunpack.c.l.b16 %v69
    %v373 = vunpack.c.l.b16 %v70
    %v374 = vunpack.c.l.b16 %v71
    %v375 = vunpack.c.l.b16 %v72
    %v376 = vunpack.c.l.b16 %v73
    %v377 = vunpack.c.l.b16 %v74
    %v378 = vunpack.c.l.b16 %v75
    %v379 = vunpack.c.l.b16 %v76
    %v380 = vunpack.c.l.b16 %v77
    %v381 = vunpack.c.l.b16 %v78
    %v382 = vunpack.c.l.b16 %v79
    %v383 = vunpack.c.l.b16 %v80
    %v384 = vunpack.c.l.b16 %v81
    %v385 = vunpack.c.l.b16 %v82
    %v386 = vunpack.c.l.b16 %v83
    %v387 = vunpack.c.l.b16 %v84
    %v388 = vunpack.c.l.b16 %v85
    %v389 = vunpack.c.l.b16 %v86
    %v390 = vunpack.c.l.b16 %v87
    %v391 = vunpack.c.l.b16 %v88
    %v392 = vunpack.c.l.b16 %v89
    %v393 = vunpack.c.l.b16 %v90
    %v394 = vunpack.c.l.b16 %v91
    %v395 = vunpack.c.l.b16 %v92
    %v396 = vunpack.c.l.b16 %v93
    %v397 = vunpack.c.l.b16 %v94
    %v398 = vunpack.c.l.b16 %v95
    %v399 = vunpack.c.l.b16 %v96
    %v400 = vunpack.c.l.b16 %v97
    %v401 = vunpack.c.l.b16 %v98
    %v402 = vunpack.c.l.b16 %v99
    %v403 = vunpack.c.l.b16 %v100
    %v404 = vunpack.c.l.b16 %v101
    %v405 = vunpack.c.l.b16 %v102
    %v406 = vunpack.c.l.b16 %v103
    %v407 = vunpack.c.l.b16 %v104
    %v408 = vunpack.c.l.b16 %v105
    %v409 = vunpack.c.l.b16 %v106
    %v410 = vunpack.c.l.b16 %v107
    %v411 = vunpack.c.l.b16 %v108
    %v412 = vunpack.c.l.b16 %v109
    %v413 = vunpack.c.l.b16 %v110
    %v414 = vunpack.c.l.b16 %v111
    %v415 = vunpack.c.l.b16 %v112
    %v416 = vunpack.c.l.b16 %v113
    %v417 = vunpack.c.l.b16 %v114
    %v418 = vunpack.c.l.b16 %v115
    %v419 = vunpack.c.l.b16 %v116
    %v420 = vunpack.c.l.b16 %v117
    %v421 = vunpack.c.l.b16 %v118
    %v422 = vunpack.c.l.b16 %v119
    %v423 = vunpack.c.l.b16 %v120
    %v424 = vunpack.c.l.b16 %v121
    %v425 = vunpack.c.l.b16 %v122
    %v426 = vunpack.c.l.b16 %v123
    %v427 = vunpack.c.l.b16 %v124
    %v428 = vunpack.c.l.b16 %v125
    %v429 = vunpack.c.l.b16 %v126
    %v430 = vunpack.c.l.b16 %v127
    %v431 = vunpack.c.l.b16 %v128
    %v432 = vunpack.c.l.b16 %v129
    %v433 = vunpack.c.l.b16 %v130
    %v434 = vunpack.c.l.b16 %v131
    %v435 = vunpack.c.l.b16 %v132
    %v436 = vunpack.c.l.b16 %v133
    %v437 = vunpack.c.l.b16 %v134
    %v438 = vunpack.c.l.b16 %v135
    %v439 = vunpack.c.l.b16 %v136
    %v440 = vunpack.c.l.b16 %v137
    %v441 = vunpack.c.l.b16 %v138
    %v442 = vunpack.c.l.b16 %v139
    %v443 = vunpack.c.l.b16 %v140
    %v444 = vunpack.c.l.b16 %v141
    %v445 = vunpack.c.l.b16 %v142
    %v446 = vunpack.c.l.b16 %v143
    %v447 = vunpack.c.l.b16 %v144
    %v448 = vunpack.c.l.b16 %v145
    %v449 = vunpack.c.l.b16 %v146
    %v450 = vunpack.c.l.b16 %v147
    %v451 = vunpack.c.l.b16 %v148
    %v452 = vunpack.c.l.b16 %v149
    %v453 = vunpack.c.l.b16 %v150
    %v454 = vunpack.c.l.b16 %v151
    %v455 = vunpack.c.l.b16 %v152
    %v456 = vunpack.c.l.b16 %v153
    %v457 = vunpack.c.l.b16 %v154
    %v458 = vunpack.c.l.b16 %v155
    %v459 = vunpack.c.l.b16 %v156
    %v460 = vunpack.c.l.b16 %v157
    %v461 = vunpack.c.l.b16 %v158
    %v462 = vunpack.c.l.b16 %v159
    %v463 = vunpack.c.l.b16 %v160
    %v464 = vunpack.c.l.b16 %v161
    %v465 = vunpack.c.l.b16 %v162
    %v466 = vunpack.c.l.b16 %v163
    %v467 = vunpack.c.l.b16 %v164
    %v468 = vunpack.c.l.b16 %v165
    %v469 = vunpack.c.l.b16 %v166
    %v470 = vunpack.c.l.b16 %v167
    %v471 = vunpack.c.l.b16 %v168
    %v472 = vunpack.c.l.b16 %v169
    %v473 = vunpack.c.l.b16 %v170
    %v474 = vunpack.c.l.b16 %v171
    %v475 = vunpack.c.l.b16 %v172
    %v476 = vunpack.c.l.b16 %v173
    %v477 = vunpack.c.l.b16 %v174
    %v478 = vunpack.c.l.b16 %v175
    %v479 = vunpack.c.l.b16 %v176
    %v480 = vpack.c.b16 %v353, %v352
    %v481 = vpack.c.b16 %v355, %v354
    %v482 = vpack.c.b16 %v357, %v356
    %v483 = vpack.c.b16 %v359, %v358
    %v484 = vpack.c.b16 %v361, %v360
    %v485 = vpack.c.b16 %v363, %v362
    %v486 = vpack.c.b16 %v365, %v364
    %v487 = vpack.c.b16 %v367, %v366
    %v488 = vpack.c.b16 %v369, %v368
    %v489 = vpack.c.b16 %v371, %v370
    %v490 = vpack.c.b16 %v373, %v372
    %v491 = vpack.c.b16 %v375, %v374
    %v492 = vpack.c.b16 %v377, %v376
    %v493 = vpack.c.b16 %v379, %v378
    %v494 = vpack.c.b16 %v381, %v380
    %v495 = vpack.c.b16 %v383, %v382
    %v496 = vpack.c.b16 %v385, %v384
    %v497 = vpack.c.b16 %v387, %v386
    %v498 = vpack.c.b16 %v389, %v388
    %v499 = vpack.c.b16 %v391, %v390
    %v500 = vpack.c.b16 %v393, %v392
    %v501 = vpack.c.b16 %v395, %v394
    %v502 = vpack.c.b16 %v397, %v396
    %v503 = vpack.c.b16 %v399, %v398
    %v504 = vpack.c.b16 %v401, %v400
    %v505 = vpack.c.b16 %v403, %v402
    %v506 = vpack.c.b16 %v405, %v404
    %v507 = vpack.c.b16 %v407, %v406
    %v508 = vpack.c.b16 %v409, %v408
    %v509 = vpack.c.b16 %v411, %v410
    %v510 = vpack.c.b16 %v413, %v412
    %v511 = vpack.c.b16 %v415, %v414
    %v512 = vpack.c.b16 %v417, %v416
    %v513 = vpack.c.b16 %v419, %v418
    %v514 = vpack.c.b16 %v421, %v420
    %v515 = vpack.c.b16 %v423, %v422
    %v516 = vpack.c.b16 %v425, %v424
    %v517 = vpack.c.b16 %v427, %v426
    %v518 = vpack.c.b16 %v429, %v428
    %v519 = vpack.c.b16 %v431, %v430
    %v520 = vpack.c.b16 %v433, %v432
    %v521 = vpack.c.b16 %v435, %v434
    %v522 = vpack.c.b16 %v437, %v436
    %v523 = vpack.c.b16 %v439, %v438
    %v524 = vpack.c.b16 %v441, %v440
    %v525 = vpack.c.b16 %v443, %v442
    %v526 = vpack.c.b16 %v445, %v444
    %v527 = vpack.c.b16 %v447, %v446
    %v528 = vpack.c.b16 %v449, %v448
    %v529 = vpack.c.b16 %v451, %v450
    %v530 = vpack.c.b16 %v453, %v452
    %v531 = vpack.c.b16 %v455, %v454
    %v532 = vpack.c.b16 %v457, %v456
    %v533 = vpack.c.b16 %v459, %v458
    %v534 = vpack.c.b16 %v461, %v460
    %v535 = vpack.c.b16 %v463, %v462
    %v536 = vpack.c.b16 %v465, %v464
    %v537 = vpack.c.b16 %v467, %v466
    %v538 = vpack.c.b16 %v469, %v468
    %v539 = vpack.c.b16 %v471, %v470
    %v540 = vpack.c.b16 %v473, %v472
    %v541 = vpack.c.b16 %v475, %v474
    %v542 = vpack.c.b16 %v477, %v476
    %v543 = vpack.c.b16 %v479, %v478
    %608 = vmatprep.subr.bf16.mxu0 0
    %609 = vmatpush1.bf16.msra.mxu0 %v480
    %610 = vmatprep.subr.bf16.mxu0 0
    %611 = vmatpush1.bf16.msra.mxu0 %v481
    %612 = vmatprep.subr.bf16.mxu0 0
    %613 = vmatpush1.bf16.msra.mxu0 %v482
    %614 = vmatprep.subr.bf16.mxu0 0
    %615 = vmatpush1.bf16.msra.mxu0 %v483
    %616 = vmatprep.subr.bf16.mxu0 0
    %617 = vmatpush1.bf16.msra.mxu0 %v484
    %618 = vmatprep.subr.bf16.mxu0 0
    %619 = vmatpush1.bf16.msra.mxu0 %v485
    %620 = vmatprep.subr.bf16.mxu0 0
    %621 = vmatpush1.bf16.msra.mxu0 %v486
    %622 = vmatprep.subr.bf16.mxu0 0
    %623 = vmatpush1.bf16.msra.mxu0 %v487
    %624 = vmatprep.subr.bf16.mxu0 0
    %625 = vmatpush1.bf16.msra.mxu0 %v488
    %626 = vmatprep.subr.bf16.mxu0 0
    %627 = vmatpush1.bf16.msra.mxu0 %v489
    %628 = vmatprep.subr.bf16.mxu0 0
    %629 = vmatpush1.bf16.msra.mxu0 %v490
    %630 = vmatprep.subr.bf16.mxu0 0
    %631 = vmatpush1.bf16.msra.mxu0 %v491
    %632 = vmatprep.subr.bf16.mxu0 0
    %633 = vmatpush1.bf16.msra.mxu0 %v492
    %634 = vmatprep.subr.bf16.mxu0 0
    %635 = vmatpush1.bf16.msra.mxu0 %v493
    %636 = vmatprep.subr.bf16.mxu0 0
    %637 = vmatpush1.bf16.msra.mxu0 %v494
    %638 = vmatprep.subr.bf16.mxu0 0
    %639 = vmatpush1.bf16.msra.mxu0 %v495
    %640 = vmatprep.mubr.bf16.mxu0 %v209
    %641 = vmatmul.mubr.bf16.gmra.mrb[0].mxu0 %v208
    %v642 = vpop.f32.mrb[0].mxu0
    %v643 = vadd.f32 %v182, %v642
    %v644 = vpop.f32.mrb[0].mxu0
    %v645 = vpop.f32.mrb[0].mxu0
    %v646 = vadd.f32 %v182, %v645
    %v647 = vpop.f32.mrb[0].mxu0
    %648 = vdwg.mxu0
    %649 = vmatprep.subr.bf16.mxu0 0
    %650 = vmatpush1.bf16.msra.mxu0 %v496
    %651 = vmatprep.subr.bf16.mxu0 0
    %652 = vmatpush1.bf16.msra.mxu0 %v497
    %653 = vmatprep.subr.bf16.mxu0 0
    %654 = vmatpush1.bf16.msra.mxu0 %v498
    %655 = vmatprep.subr.bf16.mxu0 0
    %656 = vmatpush1.bf16.msra.mxu0 %v499
    %657 = vmatprep.subr.bf16.mxu0 0
    %658 = vmatpush1.bf16.msra.mxu0 %v500
    %659 = vmatprep.subr.bf16.mxu0 0
    %660 = vmatpush1.bf16.msra.mxu0 %v501
    %661 = vmatprep.subr.bf16.mxu0 0
    %662 = vmatpush1.bf16.msra.mxu0 %v502
    %663 = vmatprep.subr.bf16.mxu0 0
    %664 = vmatpush1.bf16.msra.mxu0 %v503
    %665 = vmatprep.subr.bf16.mxu0 0
    %666 = vmatpush1.bf16.msra.mxu0 %v504
    %667 = vmatprep.subr.bf16.mxu0 0
    %668 = vmatpush1.bf16.msra.mxu0 %v505
    %669 = vmatprep.subr.bf16.mxu0 0
    %670 = vmatpush1.bf16.msra.mxu0 %v506
    %671 = vmatprep.subr.bf16.mxu0 0
    %672 = vmatpush1.bf16.msra.mxu0 %v507
    %673 = vmatprep.subr.bf16.mxu0 0
    %674 = vmatpush1.bf16.msra.mxu0 %v508
    %675 = vmatprep.subr.bf16.mxu0 0
    %676 = vmatpush1.bf16.msra.mxu0 %v509
    %677 = vmatprep.subr.bf16.mxu0 0
    %678 = vmatpush1.bf16.msra.mxu0 %v510
    %679 = vmatprep.subr.bf16.mxu0 0
    %680 = vmatpush1.bf16.msra.mxu0 %v511
    %681 = vmatprep.mubr.bf16.mxu0 %v211
    %682 = vmatmul.mubr.bf16.gmra.mrb[0].mxu0 %v210
    %v683 = vpop.f32.mrb[0].mxu0
    %v684 = vadd.f32 %v643, %v683
    %v685 = vpop.f32.mrb[0].mxu0
    %v686 = vpop.f32.mrb[0].mxu0
    %v687 = vadd.f32 %v646, %v686
    %v688 = vpop.f32.mrb[0].mxu0
    %689 = vdwg.mxu0
    %690 = vmatprep.subr.bf16.mxu0 0
    %691 = vmatpush1.bf16.msra.mxu0 %v512
    %692 = vmatprep.subr.bf16.mxu0 0
    %693 = vmatpush1.bf16.msra.mxu0 %v513
    %694 = vmatprep.subr.bf16.mxu0 0
    %695 = vmatpush1.bf16.msra.mxu0 %v514
    %696 = vmatprep.subr.bf16.mxu0 0
    %697 = vmatpush1.bf16.msra.mxu0 %v515
    %698 = vmatprep.subr.bf16.mxu0 0
    %699 = vmatpush1.bf16.msra.mxu0 %v516
    %700 = vmatprep.subr.bf16.mxu0 0
    %701 = vmatpush1.bf16.msra.mxu0 %v517
    %702 = vmatprep.subr.bf16.mxu0 0
    %703 = vmatpush1.bf16.msra.mxu0 %v518
    %704 = vmatprep.subr.bf16.mxu0 0
    %705 = vmatpush1.bf16.msra.mxu0 %v519
    %706 = vmatprep.subr.bf16.mxu0 0
    %707 = vmatpush1.bf16.msra.mxu0 %v520
    %708 = vmatprep.subr.bf16.mxu0 0
    %709 = vmatpush1.bf16.msra.mxu0 %v521
    %710 = vmatprep.subr.bf16.mxu0 0
    %711 = vmatpush1.bf16.msra.mxu0 %v522
    %712 = vmatprep.subr.bf16.mxu0 0
    %713 = vmatpush1.bf16.msra.mxu0 %v523
    %714 = vmatprep.subr.bf16.mxu0 0
    %715 = vmatpush1.bf16.msra.mxu0 %v524
    %716 = vmatprep.subr.bf16.mxu0 0
    %717 = vmatpush1.bf16.msra.mxu0 %v525
    %718 = vmatprep.subr.bf16.mxu0 0
    %719 = vmatpush1.bf16.msra.mxu0 %v526
    %720 = vmatprep.subr.bf16.mxu0 0
    %721 = vmatpush1.bf16.msra.mxu0 %v527
    %722 = vmatprep.mubr.bf16.mxu0 %v213
    %723 = vmatmul.mubr.bf16.gmra.mrb[0].mxu0 %v212
    %v724 = vpop.f32.mrb[0].mxu0
    %v725 = vadd.f32 %v684, %v724
    %v726 = vpop.f32.mrb[0].mxu0
    %v727 = vpop.f32.mrb[0].mxu0
    %v728 = vadd.f32 %v687, %v727
    %v729 = vpop.f32.mrb[0].mxu0
    %730 = vdwg.mxu0
    %731 = vmatprep.subr.bf16.mxu0 0
    %732 = vmatpush1.bf16.msra.mxu0 %v528
    %733 = vmatprep.subr.bf16.mxu0 0
    %734 = vmatpush1.bf16.msra.mxu0 %v529
    %735 = vmatprep.subr.bf16.mxu0 0
    %736 = vmatpush1.bf16.msra.mxu0 %v530
    %737 = vmatprep.subr.bf16.mxu0 0
    %738 = vmatpush1.bf16.msra.mxu0 %v531
    %739 = vmatprep.subr.bf16.mxu0 0
    %740 = vmatpush1.bf16.msra.mxu0 %v532
    %741 = vmatprep.subr.bf16.mxu0 0
    %742 = vmatpush1.bf16.msra.mxu0 %v533
    %743 = vmatprep.subr.bf16.mxu0 0
    %744 = vmatpush1.bf16.msra.mxu0 %v534
    %745 = vmatprep.subr.bf16.mxu0 0
    %746 = vmatpush1.bf16.msra.mxu0 %v535
    %747 = vmatprep.subr.bf16.mxu0 0
    %748 = vmatpush1.bf16.msra.mxu0 %v536
    %749 = vmatprep.subr.bf16.mxu0 0
    %750 = vmatpush1.bf16.msra.mxu0 %v537
    %751 = vmatprep.subr.bf16.mxu0 0
    %752 = vmatpush1.bf16.msra.mxu0 %v538
    %753 = vmatprep.subr.bf16.mxu0 0
    %754 = vmatpush1.bf16.msra.mxu0 %v539
    %755 = vmatprep.subr.bf16.mxu0 0
    %756 = vmatpush1.bf16.msra.mxu0 %v540
    %757 = vmatprep.subr.bf16.mxu0 0
    %758 = vmatpush1.bf16.msra.mxu0 %v541
    %759 = vmatprep.subr.bf16.mxu0 0
    %760 = vmatpush1.bf16.msra.mxu0 %v542
    %761 = vmatprep.subr.bf16.mxu0 0
    %762 = vmatpush1.bf16.msra.mxu0 %v543
    %763 = vmatprep.mubr.bf16.mxu0 %v215
    %764 = vmatmul.mubr.bf16.gmra.mrb[0].mxu0 %v214
    %v765 = vpop.f32.mrb[0].mxu0
    %v766 = vadd.f32 %v725, %v765
    %v767 = vpop.f32.mrb[0].mxu0
    %v768 = vpop.f32.mrb[0].mxu0
    %v769 = vadd.f32 %v728, %v768
    %v770 = vpop.f32.mrb[0].mxu0
    %771 = vdwg.mxu0
    %v772 = vmax.f32 %v766, 0.0
    %v773 = vmax.f32 %v769, 0.0
    %v774 = vpack.c.bf16 %v773, %v772
    %v775 = vld [vmem:[%s3] sm:$0xf]
    %v776 = vld [vmem:[%s3 + $0x4] sm:$0xf]
    %v777 = vld [vmem:[%s3 + $0x8] sm:$0xf]
    %v778 = vld [vmem:[%s3 + $0xc] sm:$0xf]
    %v779 = vld [vmem:[%s3 + $0x10] sm:$0xf]
    %v780 = vld [vmem:[%s3 + $0x14] sm:$0xf]
    %v781 = vld [vmem:[%s3 + $0x18] sm:$0xf]
    %v782 = vld [vmem:[%s3 + $0x1c] sm:$0xf]
    %v783 = vld [vmem:[%s3 + $0x20] sm:$0xf]
    %v784 = vld [vmem:[%s3 + $0x24] sm:$0xf]
    %v785 = vld [vmem:[%s3 + $0x28] sm:$0xf]
    %v786 = vld [vmem:[%s3 + $0x2c] sm:$0xf]
    %v787 = vld [vmem:[%s3 + $0x30] sm:$0xf]
    %v788 = vld [vmem:[%s3 + $0x34] sm:$0xf]
    %v789 = vld [vmem:[%s3 + $0x38] sm:$0xf]
    %v790 = vld [vmem:[%s3 + $0x3c] sm:$0xf]
    %v791 = vld [vmem:[%s4] sm:$0x1]
    %v793 = vlaneseq
    %v794 = vshrl.u32 %v793, 7
    %v795 = vsub.s32 0, %v794
    %v796 = vrot.slane %v791, %v795
    %v814 = vunpack.c.l.b16 %v775
    %v815 = vunpack.c.l.b16 %v776
    %v816 = vunpack.c.l.b16 %v777
    %v817 = vunpack.c.l.b16 %v778
    %v818 = vunpack.c.l.b16 %v779
    %v819 = vunpack.c.l.b16 %v780
    %v820 = vunpack.c.l.b16 %v781
    %v821 = vunpack.c.l.b16 %v782
    %v822 = vunpack.c.l.b16 %v783
    %v823 = vunpack.c.l.b16 %v784
    %v824 = vunpack.c.l.b16 %v785
    %v825 = vunpack.c.l.b16 %v786
    %v826 = vunpack.c.l.b16 %v787
    %v827 = vunpack.c.l.b16 %v788
    %v828 = vunpack.c.l.b16 %v789
    %v829 = vunpack.c.l.b16 %v790
    %v830 = vpack.c.b16 %v815, %v814
    %v831 = vpack.c.b16 %v817, %v816
    %v832 = vpack.c.b16 %v819, %v818
    %v833 = vpack.c.b16 %v821, %v820
    %v834 = vpack.c.b16 %v823, %v822
    %v835 = vpack.c.b16 %v825, %v824
    %v836 = vpack.c.b16 %v827, %v826
    %v837 = vpack.c.b16 %v829, %v828
    %846 = vmatprep.subr.bf16.mxu0 0
    %847 = vmatpush1.bf16.msra.mxu0 %v830
    %848 = vmatprep.subr.bf16.mxu0 0
    %849 = vmatpush1.bf16.msra.mxu0 %v831
    %850 = vmatprep.subr.bf16.mxu0 0
    %851 = vmatpush1.bf16.msra.mxu0 %v832
    %852 = vmatprep.subr.bf16.mxu0 0
    %853 = vmatpush1.bf16.msra.mxu0 %v833
    %854 = vmatprep.subr.bf16.mxu0 0
    %855 = vmatpush1.bf16.msra.mxu0 %v834
    %856 = vmatprep.subr.bf16.mxu0 0
    %857 = vmatpush1.bf16.msra.mxu0 %v835
    %858 = vmatprep.subr.bf16.mxu0 0
    %859 = vmatpush1.bf16.msra.mxu0 %v836
    %860 = vmatprep.subr.bf16.mxu0 0
    %861 = vmatpush1.bf16.msra.mxu0 %v837
    %862 = vmatprep.subr.bf16.mxu0 0
    %863 = vmatpush1.bf16.msra.mxu0 0
    %864 = vmatprep.subr.bf16.mxu0 0
    %865 = vmatpush1.bf16.msra.mxu0 0
    %866 = vmatprep.subr.bf16.mxu0 0
    %867 = vmatpush1.bf16.msra.mxu0 0
    %868 = vmatprep.subr.bf16.mxu0 0
    %869 = vmatpush1.bf16.msra.mxu0 0
    %870 = vmatprep.subr.bf16.mxu0 0
    %871 = vmatpush1.bf16.msra.mxu0 0
    %872 = vmatprep.subr.bf16.mxu0 0
    %873 = vmatpush1.bf16.msra.mxu0 0
    %874 = vmatprep.subr.bf16.mxu0 0
    %875 = vmatpush1.bf16.msra.mxu0 0
    %876 = vmatprep.subr.bf16.mxu0 0
    %877 = vmatpush1.bf16.msra.mxu0 0
    %878 = vmatprep.mubr.bf16.mxu0 0
    %879 = vmatmul.mubr.bf16.gmra.mrb[0].mxu0 %v774
    %v880 = vpop.f32.mrb[0].mxu0
    %v881 = vadd.f32 %v796, %v880
    %v882 = vpop.f32.mrb[0].mxu0
    %v883 = vpop.f32.mrb[0].mxu0
    %v884 = vadd.f32 %v796, %v883
    %v885 = vpop.f32.mrb[0].mxu0
    %886 = vdwg.mxu0
    %v887 = vmax.f32 %v881, 0.0
    %v888 = vmax.f32 %v884, 0.0
    %v889 = vpack.c.bf16 %v888, %v887
    %v890 = vld [vmem:[%s5] sm:$0xf]
    %v891 = vld [vmem:[%s5 + $0x4] sm:$0xf]
    %v892 = vld [vmem:[%s5 + $0x8] sm:$0xf]
    %v893 = vld [vmem:[%s5 + $0xc] sm:$0xf]
    %v894 = vld [vmem:[%s5 + $0x10] sm:$0xf]
    %v895 = vld [vmem:[%s5 + $0x14] sm:$0xf]
    %v896 = vld [vmem:[%s5 + $0x18] sm:$0xf]
    %v897 = vld [vmem:[%s5 + $0x1c] sm:$0xf]
    %v898 = vld [vmem:[%s6] sm:$0x1]
    %v900 = vlaneseq
    %v901 = vshrl.u32 %v900, 7
    %v902 = vsub.s32 0, %v901
    %v903 = vrot.slane %v898, %v902
    %v913 = vunpack.c.l.b16 %v890
    %v914 = vunpack.c.l.b16 %v891
    %v915 = vunpack.c.l.b16 %v892
    %v916 = vunpack.c.l.b16 %v893
    %v917 = vunpack.c.l.b16 %v894
    %v918 = vunpack.c.l.b16 %v895
    %v919 = vunpack.c.l.b16 %v896
    %v920 = vunpack.c.l.b16 %v897
    %v921 = vpack.c.b16 %v914, %v913
    %v922 = vpack.c.b16 %v916, %v915
    %v923 = vpack.c.b16 %v918, %v917
    %v924 = vpack.c.b16 %v920, %v919
    %vm929 = vcmask 523264
    %v931 = vsel %vm929, %v889, 0
    %933 = vmatprep.subr.bf16.mxu0 0
    %934 = vmatpush1.bf16.msra.mxu0 %v921
    %935 = vmatprep.subr.bf16.mxu0 0
    %936 = vmatpush1.bf16.msra.mxu0 %v922
    %937 = vmatprep.subr.bf16.mxu0 0
    %938 = vmatpush1.bf16.msra.mxu0 %v923
    %939 = vmatprep.subr.bf16.mxu0 0
    %940 = vmatpush1.bf16.msra.mxu0 %v924
    %941 = vmatprep.subr.bf16.mxu0 0
    %942 = vmatpush1.bf16.msra.mxu0 0
    %943 = vmatprep.subr.bf16.mxu0 0
    %944 = vmatpush1.bf16.msra.mxu0 0
    %945 = vmatprep.subr.bf16.mxu0 0
    %946 = vmatpush1.bf16.msra.mxu0 0
    %947 = vmatprep.subr.bf16.mxu0 0
    %948 = vmatpush1.bf16.msra.mxu0 0
    %949 = vmatprep.subr.bf16.mxu0 0
    %950 = vmatpush1.bf16.msra.mxu0 0
    %951 = vmatprep.subr.bf16.mxu0 0
    %952 = vmatpush1.bf16.msra.mxu0 0
    %953 = vmatprep.subr.bf16.mxu0 0
    %954 = vmatpush1.bf16.msra.mxu0 0
    %955 = vmatprep.subr.bf16.mxu0 0
    %956 = vmatpush1.bf16.msra.mxu0 0
    %957 = vmatprep.subr.bf16.mxu0 0
    %958 = vmatpush1.bf16.msra.mxu0 0
    %959 = vmatprep.subr.bf16.mxu0 0
    %960 = vmatpush1.bf16.msra.mxu0 0
    %961 = vmatprep.subr.bf16.mxu0 0
    %962 = vmatpush1.bf16.msra.mxu0 0
    %963 = vmatprep.subr.bf16.mxu0 0
    %964 = vmatpush1.bf16.msra.mxu0 0
    %965 = vmatprep.mubr.bf16.mxu0 0
    %966 = vmatmul.mubr.bf16.gmra.mrb[0].mxu0 %v931
    %v967 = vpop.f32.mrb[0].mxu0
    %v968 = vadd.f32 %v903, %v967
    %v969 = vpop.f32.mrb[0].mxu0
    %v970 = vpop.f32.mrb[0].mxu0
    %v971 = vadd.f32 %v903, %v970
    %v972 = vpop.f32.mrb[0].mxu0
    %973 = vdwg.mxu0
    %vm974 = vcmask 48128
    %975 = vst.msk [vmem:[%s7] sm:$0xff] %vm974, %v968
    %976 = vst.msk [vmem:[%s7 + $0x8] sm:$0xff] %vm974, %v971
    // Predicated region
    $region34: #{_model_forward.1} parent=1 // pred_check
      _
    $region35: #{_model_forward.1} parent=1 // pred_check_branch
      %978 = sbr.rel (0) target = $region37
    $region36: #{_model_forward.1} parent=1 // pred_region
      _
    $region37: #{_model_forward.1} parent=1 // pred_fallthru
      _
    // Predicated region
    $region38: #{_model_forward.1} parent=1 // pred_check
      _
    $region39: #{_model_forward.1} parent=1 // pred_check_branch
      %980 = sbr.rel (0) target = $region41
    $region40: #{_model_forward.1} parent=1 // pred_region
      _
    $region41: #{_model_forward.1} parent=1 // pred_fallthru
      _
    %981 = vsyncpa [#allocation3], 1

</llo_original>
